<compile_context>
chip_gen: v7x
topology: tpu7x:2x2x1
jax: 0.10.0
libtpu: 0.0.40
codegen_flags: <defaults>
</compile_context>

<pallas_src>
import numpy as np
import jax
import jax.numpy as jnp
from jax.experimental import pallas as pl
from jax.experimental.pallas import tpu as pltpu

# ---------------- problem sizes (small, consistent with the module) ----------
BATCH = 8             # demo batch
STATE_SIZE = 8        # state_size
ACTION_SIZE = 4       # action_size (a_dim)
N = 16                # params['num_points']  (num centroids)
QUANT = 8             # params['quantiles']
H = 32                # params['layer_size']
HA = 32               # params['layer_size_action_side']
MAX_A = 1.0           # env.action_space.high[0]
BETA = 2.0            # params['temperature']

NA = N * ACTION_SIZE        # 64   flat centroid-location width
NQ = N * QUANT              # 128  flat centroid-quantile width
XW = 16                     # packed input width:  s(8) | a(4) | 0-pad(4)
OUT_LANES = 128             # lane-dense output slab width (>= QUANT)
W_ROWS = 216                # packed constant-slab rows (multiple of 8)

# TODO(synk): nn.Dropout in the location module is stochastic in train mode; we
# implement the eval-mode (identity) behaviour. Dueling / noisy / layernorm
# variants of the module are not implemented.
# NOTE: the softmax max-subtraction is dropped because with MAX_A=1, BETA=2 the
# logits are bounded in [-8, 0]; for huge action ranges / temperatures keep it.


def _net_forward_kernel(x_ref, w_ref, out_ref):
    f32 = jnp.float32
    x = x_ref[...]                           # [TB, 16]  (s | a | 0)

    # ---- unpack the single constant slab (static ref slices, one DMA total) --
    w0  = w_ref[0:16, :]                     # [16, 128] fused layer-0 weights
    vw2 = w_ref[16:48, 0:H]                  # [32, 32]
    vw3 = w_ref[48:80, 0:H]                  # [32, 32]
    vw4 = w_ref[80:112, :]                   # [32, 128]
    lw2 = w_ref[112:144, 0:NA]               # [32, 64]
    ga  = w_ref[144:208, :]                  # [64, 128] per-centroid group-sum,
                                             #           replicated over quantiles
    b0  = w_ref[208:209, :]                  # [1, 128]  (vb1 | lb1 | 0)
    vb2 = w_ref[209:210, 0:H]
    vb3 = w_ref[210:211, 0:H]
    vb4 = w_ref[211:212, :]
    lb2 = w_ref[212:213, 0:NA]

    # ---- fused first layer: value hidden-1 | location hidden | replicated a --
    y0 = jnp.dot(x, w0, preferred_element_type=f32) + b0        # [TB, 128]
    hg = jnp.maximum(y0[:, 0:H + HA], 0.0)                      # ReLU on both hiddens
    h = hg[:, 0:H]                                              # [TB, 32]
    g = hg[:, H:H + HA]                                         # [TB, 32]
    a_rep = y0[:, H + HA:H + HA + NA]                           # [TB, 64] = a tiled N times

    # ---- value_module tail: Linear-ReLU x2 -> Linear(N*Q) --------------------
    h = jnp.maximum(jnp.dot(h, vw2, preferred_element_type=f32) + vb2, 0.0)
    h = jnp.maximum(jnp.dot(h, vw3, preferred_element_type=f32) + vb3, 0.0)
    cq_flat = jnp.dot(h, vw4, preferred_element_type=f32) + vb4  # [TB, N*Q]

    # ---- location_module tail: Linear -> tanh * max_a ------------------------
    loc_flat = MAX_A * jnp.tanh(
        jnp.dot(g, lw2, preferred_element_type=f32) + lb2)       # [TB, N*A]

    # ---- rbf_function_on_action, computed in the n*Q+q replicated layout -----
    diff = loc_flat - a_rep
    sq_rep = jnp.dot(diff * diff, ga, preferred_element_type=f32)  # [TB, 128]
    e_rep = jnp.exp(-BETA * jnp.sqrt(sq_rep + 1e-7))               # lane n*Q+q = e_n
    denom = jnp.sum(e_rep, axis=1, keepdims=True)                  # = Q * sum_n e_n
    w_rep = e_rep * (float(QUANT) * pl.reciprocal(denom, approx=False))

    # ---- out[b, q] = sum_n w[b, n] * cq[b, n, q] ------------------------------
    prod = w_rep * cq_flat                                         # [TB, 128]
    # XLU tree-reduction over centroid groups (stride Q lanes). After these
    # rolls every lane j holds out[b, j mod Q]; the result is independent of
    # the roll direction because the lane-period halves at every step.
    s_ = NQ // 2
    while s_ >= QUANT:
        prod = prod + pltpu.roll(prod, shift=s_, axis=1)
        s_ //= 2
    out_ref[...] = prod                                            # lane-dense store


# ---------------- wrapper: param packing + jitted pallas_call ----------------
def pack_params(params):
    """Pack weights, biases and selector constants into one (216, 128) slab."""
    (vw1, vb1, vw2, vb2, vw3, vb3, vw4, vb4, lw1, lb1, lw2, lb2) = params
    slab = np.zeros((W_ROWS, 128), np.float32)

    # fused layer-0 weight: cols 0:32 value-hidden, 32:64 loc-hidden,
    # 64:128 action replication (x cols 8:12 are the action)
    slab[0:8, 0:H] = np.asarray(vw1)
    slab[0:8, H:H + HA] = np.asarray(lw1)
    for i in range(ACTION_SIZE):
        for n in range(N):
            slab[STATE_SIZE + i, H + HA + n * ACTION_SIZE + i] = 1.0

    slab[16:48, 0:H] = np.asarray(vw2)
    slab[48:80, 0:H] = np.asarray(vw3)
    slab[80:112, 0:NQ] = np.asarray(vw4)
    slab[112:144, 0:NA] = np.asarray(lw2)

    # ga_rep[n*A + i, m*Q + q] = (n == m): per-centroid sum over the action
    # dim, with the result replicated across the Q quantile lanes.
    for n in range(N):
        slab[144 + n * ACTION_SIZE:144 + (n + 1) * ACTION_SIZE,
             n * QUANT:(n + 1) * QUANT] = 1.0

    slab[208, 0:H] = np.asarray(vb1).reshape(-1)
    slab[208, H:H + HA] = np.asarray(lb1).reshape(-1)
    slab[209, 0:H] = np.asarray(vb2).reshape(-1)
    slab[210, 0:H] = np.asarray(vb3).reshape(-1)
    slab[211, 0:NQ] = np.asarray(vb4).reshape(-1)
    slab[212, 0:NA] = np.asarray(lb2).reshape(-1)
    return jnp.asarray(slab)


def _batch_tiling(batch):
    """Pick (padded_batch, tile) with tile <= 512 and minimal padding.

    Batches > 256 always get >= 2 grid steps so the 'parallel' batch axis can
    shard across both v7x TensorCores.
    """
    tb_max = 512
    b8 = max(8, ((batch + 7) // 8) * 8)
    if b8 <= 256:
        return b8, b8                      # single tile, minimal padding
    nsteps = max(2, -(-b8 // tb_max))
    tb = ((-(-b8 // nsteps) + 7) // 8) * 8
    return nsteps * tb, tb


@jax.jit
def net_forward(s, a, wslab):
    batch = s.shape[0]
    b_pad, tb = _batch_tiling(batch)

    # pack [s | a] into one lane-aligned input slab (padded rows stay zero)
    x = jnp.zeros((b_pad, XW), jnp.float32)
    x = x.at[:batch, 0:STATE_SIZE].set(s)
    x = x.at[:batch, STATE_SIZE:STATE_SIZE + ACTION_SIZE].set(a)

    out_full = pl.pallas_call(
        _net_forward_kernel,
        out_shape=jax.ShapeDtypeStruct((b_pad, OUT_LANES), jnp.float32),
        grid=(b_pad // tb,),
        in_specs=[
            pl.BlockSpec((tb, XW), lambda i: (i, 0)),
            pl.BlockSpec((W_ROWS, 128), lambda i: (0, 0)),   # constant: DMA'd once
        ],
        out_specs=pl.BlockSpec((tb, OUT_LANES), lambda i: (i, 0)),
        compiler_params=pltpu.CompilerParams(
            dimension_semantics=("parallel",)),
    )(x, wslab)
    return out_full[:batch, :QUANT]


# ---------------- pure-JAX reference (mirrors the PyTorch code path) ---------
def net_forward_ref(s, a, params):
    (vw1, vb1, vw2, vb2, vw3, vb3, vw4, vb4, lw1, lb1, lw2, lb2) = params
    h = jax.nn.relu(s @ vw1 + vb1)
    h = jax.nn.relu(h @ vw2 + vb2)
    h = jax.nn.relu(h @ vw3 + vb3)
    cq = (h @ vw4 + vb4).reshape(s.shape[0], N, QUANT)

    g = jax.nn.relu(s @ lw1 + lb1)
    loc = (MAX_A * jnp.tanh(g @ lw2 + lb2)).reshape(s.shape[0], N, ACTION_SIZE)

    diff = loc - a[:, None, :]
    dist = jnp.sqrt(jnp.sum(diff * diff, axis=2) + 1e-7)
    w = jax.nn.softmax(-BETA * dist, axis=1)
    return jnp.einsum('bn,bnq->bq', w, cq)


# ---------------- deterministic parameter init -------------------------------
def init_params(key):
    ks = jax.random.split(key, 12)

    def lin(kw, kb, fan_in, fan_out):
        lim = 1.0 / np.sqrt(fan_in)
        w = jax.random.uniform(kw, (fan_in, fan_out), jnp.float32, -lim, lim)
        b = jax.random.uniform(kb, (1, fan_out), jnp.float32, -lim, lim)
        return w, b

    vw1, vb1 = lin(ks[0], ks[1], STATE_SIZE, H)
    vw2, vb2 = lin(ks[2], ks[3], H, H)
    vw3, vb3 = lin(ks[4], ks[5], H, H)
    vw4, vb4 = lin(ks[6], ks[7], H, N * QUANT)

    # location_module[0]: xavier_uniform weight, zero bias
    xlim = np.sqrt(6.0 / (STATE_SIZE + HA))
    lw1 = jax.random.uniform(ks[8], (STATE_SIZE, HA), jnp.float32, -xlim, xlim)
    lb1 = jnp.zeros((1, HA), jnp.float32)
    # location_module[3]: weight ~ U(-0.1, 0.1), bias ~ U(-1, 1)
    lw2 = jax.random.uniform(ks[9], (HA, N * ACTION_SIZE), jnp.float32, -0.1, 0.1)
    lb2 = jax.random.uniform(ks[10], (1, N * ACTION_SIZE), jnp.float32, -1.0, 1.0)

    return (vw1, vb1, vw2, vb2, vw3, vb3, vw4, vb4, lw1, lb1, lw2, lb2)


if __name__ == "__main__":
    key = jax.random.PRNGKey(0)
    k_s, k_a, k_p = jax.random.split(key, 3)
    params = init_params(k_p)
    wslab = pack_params(params)          # packed once, reused per call

    # small demo batch (single tile / single grid step)
    s = jax.random.normal(k_s, (BATCH, STATE_SIZE), jnp.float32)
    a = jax.random.uniform(k_a, (BATCH, ACTION_SIZE), jnp.float32, -MAX_A, MAX_A)
    out = jax.block_until_ready(net_forward(s, a, wslab))
    ref = jax.block_until_ready(net_forward_ref(s, a, params))
    np.testing.assert_allclose(np.asarray(out), np.asarray(ref), rtol=1e-4, atol=1e-5)
    assert out.shape == (BATCH, QUANT)

    # larger batch exercises padding + the >=2-step "parallel" grid path
    b2 = 300
    k_s2, k_a2 = jax.random.split(jax.random.PRNGKey(1), 2)
    s2 = jax.random.normal(k_s2, (b2, STATE_SIZE), jnp.float32)
    a2 = jax.random.uniform(k_a2, (b2, ACTION_SIZE), jnp.float32, -MAX_A, MAX_A)
    out2 = jax.block_until_ready(net_forward(s2, a2, wslab))
    ref2 = jax.block_until_ready(net_forward_ref(s2, a2, params))
    np.testing.assert_allclose(np.asarray(out2), np.asarray(ref2), rtol=1e-4, atol=1e-5)
    assert out2.shape == (b2, QUANT)

    print("KERNEL_OK")
</pallas_src>

<mosaic_0001>
module attributes {stable_mosaic.version = 11 : i64} {
  func.func @_net_forward_kernel(%arg0: i32, %arg1: memref<8x16xf32, #tpu.memory_space<vmem>>, %arg2: memref<216x128xf32, #tpu.memory_space<vmem>>, %arg3: memref<8x128xf32, #tpu.memory_space<vmem>>) attributes {dimension_semantics = [#tpu.dimension_semantics<parallel>], iteration_bounds = array<i64: 1>, scalar_prefetch = 0 : i64, scratch_operands = 0 : i64, tpu.core_type = #tpu.core_type<tc>, window_params = [{transform_indices = @transform_0, window_bounds = array<i64: 8, 16>}, {pipeline_mode = #tpu.pipeline_mode<synchronous>, transform_indices = @transform_1, window_bounds = array<i64: 216, 128>}, {transform_indices = @transform_2, window_bounds = array<i64: 8, 128>}]} {
    %c0 = arith.constant 0 : index
    %c0_0 = arith.constant 0 : index
    %0 = vector.load %arg1[%c0, %c0_0] : memref<8x16xf32, #tpu.memory_space<vmem>>, vector<8x16xf32>
    %c0_1 = arith.constant 0 : index
    %c0_2 = arith.constant 0 : index
    %1 = vector.load %arg2[%c0_1, %c0_2] : memref<216x128xf32, #tpu.memory_space<vmem>>, vector<16x128xf32>
    %c16 = arith.constant 16 : index
    %c0_3 = arith.constant 0 : index
    %2 = vector.load %arg2[%c16, %c0_3] : memref<216x128xf32, #tpu.memory_space<vmem>>, vector<32x32xf32>
    %c48 = arith.constant 48 : index
    %c0_4 = arith.constant 0 : index
    %3 = vector.load %arg2[%c48, %c0_4] : memref<216x128xf32, #tpu.memory_space<vmem>>, vector<32x32xf32>
    %c80 = arith.constant 80 : index
    %c0_5 = arith.constant 0 : index
    %4 = vector.load %arg2[%c80, %c0_5] : memref<216x128xf32, #tpu.memory_space<vmem>>, vector<32x128xf32>
    %c112 = arith.constant 112 : index
    %c0_6 = arith.constant 0 : index
    %5 = vector.load %arg2[%c112, %c0_6] : memref<216x128xf32, #tpu.memory_space<vmem>>, vector<32x64xf32>
    %c144 = arith.constant 144 : index
    %c0_7 = arith.constant 0 : index
    %6 = vector.load %arg2[%c144, %c0_7] : memref<216x128xf32, #tpu.memory_space<vmem>>, vector<64x128xf32>
    %c208 = arith.constant 208 : index
    %c0_8 = arith.constant 0 : index
    %7 = vector.load %arg2[%c208, %c0_8] : memref<216x128xf32, #tpu.memory_space<vmem>>, vector<1x128xf32>
    %c209 = arith.constant 209 : index
    %c0_9 = arith.constant 0 : index
    %8 = vector.load %arg2[%c209, %c0_9] : memref<216x128xf32, #tpu.memory_space<vmem>>, vector<1x32xf32>
    %c210 = arith.constant 210 : index
    %c0_10 = arith.constant 0 : index
    %9 = vector.load %arg2[%c210, %c0_10] : memref<216x128xf32, #tpu.memory_space<vmem>>, vector<1x32xf32>
    %c211 = arith.constant 211 : index
    %c0_11 = arith.constant 0 : index
    %10 = vector.load %arg2[%c211, %c0_11] : memref<216x128xf32, #tpu.memory_space<vmem>>, vector<1x128xf32>
    %c212 = arith.constant 212 : index
    %c0_12 = arith.constant 0 : index
    %11 = vector.load %arg2[%c212, %c0_12] : memref<216x128xf32, #tpu.memory_space<vmem>>, vector<1x64xf32>
    %cst = arith.constant dense<0.000000e+00> : vector<8x128xf32>
    %12 = tpu.matmul %0, %1, %cst {dimension_numbers = #tpu.dot_dimension_numbers<[1], [0], [0], [1], [0, 0, 1, 1], [], []>} : vector<8x16xf32>, vector<16x128xf32>, vector<8x128xf32> -> vector<8x128xf32>
    %13 = vector.broadcast %7 : vector<1x128xf32> to vector<8x128xf32>
    %14 = arith.addf %12, %13 : vector<8x128xf32>
    %15 = vector.extract_strided_slice %14 {offsets = [0, 0], sizes = [8, 64], strides = [1, 1]} : vector<8x128xf32> to vector<8x64xf32>
    %cst_13 = arith.constant 0.000000e+00 : f32
    %16 = vector.broadcast %cst_13 : f32 to vector<8x64xf32>
    %17 = arith.maximumf %15, %16 : vector<8x64xf32>
    %18 = vector.extract_strided_slice %17 {offsets = [0, 0], sizes = [8, 32], strides = [1, 1]} : vector<8x64xf32> to vector<8x32xf32>
    %19 = vector.extract_strided_slice %17 {offsets = [0, 32], sizes = [8, 32], strides = [1, 1]} : vector<8x64xf32> to vector<8x32xf32>
    %20 = vector.extract_strided_slice %14 {offsets = [0, 64], sizes = [8, 64], strides = [1, 1]} : vector<8x128xf32> to vector<8x64xf32>
    %cst_14 = arith.constant dense<0.000000e+00> : vector<8x32xf32>
    %21 = tpu.matmul %18, %2, %cst_14 {dimension_numbers = #tpu.dot_dimension_numbers<[1], [0], [0], [1], [0, 0, 1, 1], [], []>} : vector<8x32xf32>, vector<32x32xf32>, vector<8x32xf32> -> vector<8x32xf32>
    %22 = vector.broadcast %8 : vector<1x32xf32> to vector<8x32xf32>
    %23 = arith.addf %21, %22 : vector<8x32xf32>
    %cst_15 = arith.constant 0.000000e+00 : f32
    %24 = vector.broadcast %cst_15 : f32 to vector<8x32xf32>
    %25 = arith.maximumf %23, %24 : vector<8x32xf32>
    %cst_16 = arith.constant dense<0.000000e+00> : vector<8x32xf32>
    %26 = tpu.matmul %25, %3, %cst_16 {dimension_numbers = #tpu.dot_dimension_numbers<[1], [0], [0], [1], [0, 0, 1, 1], [], []>} : vector<8x32xf32>, vector<32x32xf32>, vector<8x32xf32> -> vector<8x32xf32>
    %27 = vector.broadcast %9 : vector<1x32xf32> to vector<8x32xf32>
    %28 = arith.addf %26, %27 : vector<8x32xf32>
    %cst_17 = arith.constant 0.000000e+00 : f32
    %29 = vector.broadcast %cst_17 : f32 to vector<8x32xf32>
    %30 = arith.maximumf %28, %29 : vector<8x32xf32>
    %cst_18 = arith.constant dense<0.000000e+00> : vector<8x128xf32>
    %31 = tpu.matmul %30, %4, %cst_18 {dimension_numbers = #tpu.dot_dimension_numbers<[1], [0], [0], [1], [0, 0, 1, 1], [], []>} : vector<8x32xf32>, vector<32x128xf32>, vector<8x128xf32> -> vector<8x128xf32>
    %32 = vector.broadcast %10 : vector<1x128xf32> to vector<8x128xf32>
    %33 = arith.addf %31, %32 : vector<8x128xf32>
    %cst_19 = arith.constant dense<0.000000e+00> : vector<8x64xf32>
    %34 = tpu.matmul %19, %5, %cst_19 {dimension_numbers = #tpu.dot_dimension_numbers<[1], [0], [0], [1], [0, 0, 1, 1], [], []>} : vector<8x32xf32>, vector<32x64xf32>, vector<8x64xf32> -> vector<8x64xf32>
    %35 = vector.broadcast %11 : vector<1x64xf32> to vector<8x64xf32>
    %36 = arith.addf %34, %35 : vector<8x64xf32>
    %37 = math.tanh %36 : vector<8x64xf32>
    %cst_20 = arith.constant 1.000000e+00 : f32
    %38 = vector.broadcast %cst_20 : f32 to vector<8x64xf32>
    %39 = arith.mulf %38, %37 : vector<8x64xf32>
    %40 = arith.subf %39, %20 : vector<8x64xf32>
    %41 = arith.mulf %40, %40 : vector<8x64xf32>
    %cst_21 = arith.constant dense<0.000000e+00> : vector<8x128xf32>
    %42 = tpu.matmul %41, %6, %cst_21 {dimension_numbers = #tpu.dot_dimension_numbers<[1], [0], [0], [1], [0, 0, 1, 1], [], []>} : vector<8x64xf32>, vector<64x128xf32>, vector<8x128xf32> -> vector<8x128xf32>
    %cst_22 = arith.constant 1.000000e-07 : f32
    %43 = vector.broadcast %cst_22 : f32 to vector<8x128xf32>
    %44 = arith.addf %42, %43 : vector<8x128xf32>
    %45 = math.sqrt %44 : vector<8x128xf32>
    %cst_23 = arith.constant -2.000000e+00 : f32
    %46 = vector.broadcast %cst_23 : f32 to vector<8x128xf32>
    %47 = arith.mulf %46, %45 : vector<8x128xf32>
    %48 = math.exp %47 : vector<8x128xf32>
    %cst_24 = arith.constant dense<0.000000e+00> : vector<8xf32>
    %49 = vector.multi_reduction <add>, %48, %cst_24 [1] : vector<8x128xf32> to vector<8xf32>
    %50 = vector.shape_cast %49 : vector<8xf32> to vector<8x1xf32>
    %51 = tpu.reciprocal %50 : vector<8x1xf32> -> vector<8x1xf32>
    %cst_25 = arith.constant 8.000000e+00 : f32
    %52 = vector.broadcast %cst_25 : f32 to vector<8x1xf32>
    %53 = arith.mulf %52, %51 : vector<8x1xf32>
    %54 = vector.broadcast %53 : vector<8x1xf32> to vector<8x128xf32>
    %55 = arith.mulf %48, %54 : vector<8x128xf32>
    %56 = arith.mulf %55, %33 : vector<8x128xf32>
    %c64_i32 = arith.constant 64 : i32
    %57 = tpu.dynamic_rotate %56 by %c64_i32 dim 1 : vector<8x128xf32>, i32 -> vector<8x128xf32>
    %58 = arith.addf %56, %57 : vector<8x128xf32>
    %c32_i32 = arith.constant 32 : i32
    %59 = tpu.dynamic_rotate %58 by %c32_i32 dim 1 : vector<8x128xf32>, i32 -> vector<8x128xf32>
    %60 = arith.addf %58, %59 : vector<8x128xf32>
    %c16_i32 = arith.constant 16 : i32
    %61 = tpu.dynamic_rotate %60 by %c16_i32 dim 1 : vector<8x128xf32>, i32 -> vector<8x128xf32>
    %62 = arith.addf %60, %61 : vector<8x128xf32>
    %c8_i32 = arith.constant 8 : i32
    %63 = tpu.dynamic_rotate %62 by %c8_i32 dim 1 : vector<8x128xf32>, i32 -> vector<8x128xf32>
    %64 = arith.addf %62, %63 : vector<8x128xf32>
    %c0_26 = arith.constant 0 : index
    %c0_27 = arith.constant 0 : index
    %65 = vector.load %arg3[%c0_26, %c0_27] : memref<8x128xf32, #tpu.memory_space<vmem>>, vector<8x128xf32>
    tpu.vector_store %arg3[%c0_26, %c0_27], %64 {strides = array<i32>} : memref<8x128xf32, #tpu.memory_space<vmem>>, vector<8x128xf32>,
    return
  }
  func.func @transform_0(%arg0: i32) -> (i32, i32) {
    %c0_i32 = arith.constant 0 : i32
    %c0_i32_0 = arith.constant 0 : i32
    return %arg0, %c0_i32 : i32, i32
  }
  func.func @transform_1(%arg0: i32) -> (i32, i32) {
    %c0_i32 = arith.constant 0 : i32
    %c0_i32_0 = arith.constant 0 : i32
    %c0_i32_1 = arith.constant 0 : i32
    return %c0_i32, %c0_i32_0 : i32, i32
  }
  func.func @transform_2(%arg0: i32) -> (i32, i32) {
    %c0_i32 = arith.constant 0 : i32
    %c0_i32_0 = arith.constant 0 : i32
    return %arg0, %c0_i32 : i32, i32
  }
}

</mosaic_0001>

<llo_original>
// kernel: net_forward.1
$region0: #{net_forward.1}
  #allocation0 [shape = 'u32[]', space=smem, size = 0x4, offset = 0x4, fixed_abs, tag = 'smem constant byte address 0x4 - core index']
  #allocation1 [shape = 'u32[144,128]{1,0:T(1,128)}', space=vmem, size = 0x12000, scoped, tag = 'internal scratch']
  %s0 = inlined_call_operand.vmem [shape: f32[8,16], index: 0, kind: input, shape index: {}]
  %s1 = inlined_call_operand.hbm [shape: f32[216,128], index: 1, kind: input, shape index: {}]
  %s2 = inlined_call_operand.hbm [shape: f32[8,128], index: 2, kind: output, shape index: {}]
  %s3 = sld [smem:[#allocation0]]
  $region22: #{net_forward.1} parent=0
    _
  %s5 = ssub.s32 1, %s3
  %s6 = scalar_select 0, %s5, %s3
  $region1: #{net_forward.1} parent=0
    #allocation2 [shape = 'u8[110592]{0}', space=vmem, size = 0x1b000, scoped, tag = 'input window, operand 1, single buffered']
    #allocation3 [shape = 's32[1]{0}', space=sflag, size = 0x4, scoped, tag = 'scoped memory for net_forward.1']
    #allocation4 [shape = 's32[1]{0}', space=sflag, size = 0x4, scoped, tag = 'scoped memory for net_forward.1']
    #allocation5 [shape = 'u8[4096]{0}', space=vmem, size = 0x1000, scoped, tag = 'output window, operand 0, single buffered']
    %7 = vsyncpa [#allocation3], 0
    %8 = vsyncpa [#allocation4], 0
    // Predicated region
    $region2: #{net_forward.1} parent=1 // pred_check
      _
    $region3: #{net_forward.1} parent=1 // pred_check_branch
      %10 = sbr.rel (0) target = $region5
    $region4: #{net_forward.1} parent=1 // pred_region
      _
    $region5: #{net_forward.1} parent=1 // pred_fallthru
      _
    // Predicated region
    $region6: #{net_forward.1} parent=1 // pred_check
      _
    $region7: #{net_forward.1} parent=1 // pred_check_branch
      %12 = sbr.rel (0) target = $region9
    $region8: #{net_forward.1} parent=1 // pred_region
      %s14 = ssub.s32 3456, 3456
      %15 = vsyncadd [#allocation3], %s14
      %s16 = sshll.u32 [#allocation2], 4
      %s17 = int_to_ptr.vmem [resolvable:$true] %s16
      %22 = dma.hbm_to_vmem [thread:$0]  %s1, 3456, %s17, [#allocation3], 128, 128, 8
    $region9: #{net_forward.1} parent=1 // pred_fallthru
      _
    // Predicated region
    $region10: #{net_forward.1} parent=1 // pred_check
      _
    $region11: #{net_forward.1} parent=1 // pred_check_branch
      %24 = sbr.rel (0) target = $region13
    $region12: #{net_forward.1} parent=1 // pred_region
      %25 = dma.done [#allocation3], 3456
    $region13: #{net_forward.1} parent=1 // pred_fallthru
      _
    %v26 = vld [vmem:[%s0] sm:$0xff]
    %v27 = vld [vmem:[#allocation2] sm:$0xff]
    %v28 = vld [vmem:[#allocation2 + $0x8] sm:$0xff]
    %v29 = vld [vmem:[#allocation2 + $0x10] sm:$0xff]
    %v30 = vld [vmem:[#allocation2 + $0x18] sm:$0xff]
    %v31 = vld [vmem:[#allocation2 + $0x20] sm:$0xff]
    %v32 = vld [vmem:[#allocation2 + $0x28] sm:$0xff]
    %v33 = vld [vmem:[#allocation2 + $0x30] sm:$0xff]
    %v34 = vld [vmem:[#allocation2 + $0x38] sm:$0xff]
    %v35 = vld [vmem:[#allocation2 + $0x40] sm:$0xff]
    %v36 = vld [vmem:[#allocation2 + $0x48] sm:$0xff]
    %v37 = vld [vmem:[#allocation2 + $0x50] sm:$0xff]
    %v38 = vld [vmem:[#allocation2 + $0x58] sm:$0xff]
    %v39 = vld [vmem:[#allocation2 + $0x60] sm:$0xff]
    %v40 = vld [vmem:[#allocation2 + $0x68] sm:$0xff]
    %v41 = vld [vmem:[#allocation2 + $0x70] sm:$0xff]
    %v42 = vld [vmem:[#allocation2 + $0x78] sm:$0xff]
    %v43 = vld [vmem:[#allocation2 + $0x80] sm:$0xff]
    %v44 = vld [vmem:[#allocation2 + $0x88] sm:$0xff]
    %v45 = vld [vmem:[#allocation2 + $0x90] sm:$0xff]
    %v46 = vld [vmem:[#allocation2 + $0x98] sm:$0xff]
    %v47 = vld [vmem:[#allocation2 + $0xa0] sm:$0xff]
    %v48 = vld [vmem:[#allocation2 + $0xa8] sm:$0xff]
    %v49 = vld [vmem:[#allocation2 + $0xb0] sm:$0xff]
    %v50 = vld [vmem:[#allocation2 + $0xb8] sm:$0xff]
    %v51 = vld [vmem:[#allocation2 + $0xc0] sm:$0xff]
    %v52 = vld [vmem:[#allocation2 + $0xc8] sm:$0xff]
    %v53 = vld [vmem:[#allocation2 + $0xd0] sm:$0x1]
    %v54 = vld [vmem:[#allocation2 + $0xd1] sm:$0x1]
    %v55 = vld [vmem:[#allocation2 + $0xd2] sm:$0x1]
    %v56 = vld [vmem:[#allocation2 + $0xd3] sm:$0x1]
    %v57 = vld [vmem:[#allocation2 + $0xd4] sm:$0x1]
    %v58 = vlaneseq
    %v59 = vshrl.u32 %v58, 7
    %v60 = vsub.s32 0, %v59
    %v61 = vrot.slane %v53, %v60
    %vm62 = vcmask 130048
    %v64 = vsel %vm62, %v26, 0
    %66 = vmatprep.subr.mxu0 0.0
    %67 = vmatpush1.msra.mxu0 %v27
    %68 = vmatprep.subr.mxu0 0.0
    %69 = vmatpush1.msra.mxu0 %v28
    %70 = vmatprep.subr.mxu0 0.0
    %71 = vmatpush1.msra.mxu0 0.0
    %72 = vmatprep.subr.mxu0 0.0
    %73 = vmatpush1.msra.mxu0 0.0
    %74 = vmatprep.subr.mxu0 0.0
    %75 = vmatpush1.msra.mxu0 0.0
    %76 = vmatprep.subr.mxu0 0.0
    %77 = vmatpush1.msra.mxu0 0.0
    %78 = vmatprep.subr.mxu0 0.0
    %79 = vmatpush1.msra.mxu0 0.0
    %80 = vmatprep.subr.mxu0 0.0
    %81 = vmatpush1.msra.mxu0 0.0
    %82 = vmatprep.subr.mxu0 0.0
    %83 = vmatpush1.msra.mxu0 0.0
    %84 = vmatprep.subr.mxu0 0.0
    %85 = vmatpush1.msra.mxu0 0.0
    %86 = vmatprep.subr.mxu0 0.0
    %87 = vmatpush1.msra.mxu0 0.0
    %88 = vmatprep.subr.mxu0 0.0
    %89 = vmatpush1.msra.mxu0 0.0
    %90 = vmatprep.subr.mxu0 0.0
    %91 = vmatpush1.msra.mxu0 0.0
    %92 = vmatprep.subr.mxu0 0.0
    %93 = vmatpush1.msra.mxu0 0.0
    %94 = vmatprep.subr.mxu0 0.0
    %95 = vmatpush1.msra.mxu0 0.0
    %96 = vmatprep.subr.mxu0 0.0
    %97 = vmatpush1.msra.mxu0 0.0
    %98 = vmatprep.subr.mxu0 0.0
    %99 = vmatpush1.msra.mxu0 0.0
    %100 = vmatprep.subr.mxu0 0.0
    %101 = vmatpush1.msra.mxu0 0.0
    %102 = vmatprep.subr.mxu0 0.0
    %103 = vmatpush1.msra.mxu0 0.0
    %104 = vmatprep.subr.mxu0 0.0
    %105 = vmatpush1.msra.mxu0 0.0
    %106 = vmatprep.subr.mxu0 0.0
    %107 = vmatpush1.msra.mxu0 0.0
    %108 = vmatprep.subr.mxu0 0.0
    %109 = vmatpush1.msra.mxu0 0.0
    %110 = vmatprep.subr.mxu0 0.0
    %111 = vmatpush1.msra.mxu0 0.0
    %112 = vmatprep.subr.mxu0 0.0
    %113 = vmatpush1.msra.mxu0 0.0
    %114 = vmatprep.subr.mxu0 0.0
    %115 = vmatpush1.msra.mxu0 0.0
    %116 = vmatprep.subr.mxu0 0.0
    %117 = vmatpush1.msra.mxu0 0.0
    %118 = vmatprep.subr.mxu0 0.0
    %119 = vmatpush1.msra.mxu0 0.0
    %120 = vmatprep.subr.mxu0 0.0
    %121 = vmatpush1.msra.mxu0 0.0
    %122 = vmatprep.subr.mxu0 0.0
    %123 = vmatpush1.msra.mxu0 0.0
    %124 = vmatprep.subr.mxu0 0.0
    %125 = vmatpush1.msra.mxu0 0.0
    %126 = vmatprep.subr.mxu0 0.0
    %127 = vmatpush1.msra.mxu0 0.0
    %128 = vmatprep.subr.mxu0 0.0
    %129 = vmatpush1.msra.mxu0 0.0
    %130 = vmatprep.mubr.f32.mxu0 0.0
    %131 = vmatmul.mubr.f32.gmra.mrb[0].mxu0 %v64
    %v132 = vpop.f32.mrb[0].mxu0
    %v133 = vadd.f32 %v61, %v132
    %v134 = vpop.f32.mrb[0].mxu0
    %135 = vdwg.mxu0
    %v136 = vmax.f32 %v133, 0.0
    %v137 = vlaneseq
    %v138 = vshrl.u32 %v137, 7
    %v139 = vsub.s32 0, %v138
    %v140 = vrot.slane %v54, %v139
    %vm141 = vcmask 261120
    %v143 = vsel %vm141, %v136, 0
    %145 = vmatprep.subr.mxu0 0.0
    %146 = vmatpush1.msra.mxu0 %v29
    %147 = vmatprep.subr.mxu0 0.0
    %148 = vmatpush1.msra.mxu0 %v30
    %149 = vmatprep.subr.mxu0 0.0
    %150 = vmatpush1.msra.mxu0 %v31
    %151 = vmatprep.subr.mxu0 0.0
    %152 = vmatpush1.msra.mxu0 %v32
    %153 = vmatprep.subr.mxu0 0.0
    %154 = vmatpush1.msra.mxu0 0.0
    %155 = vmatprep.subr.mxu0 0.0
    %156 = vmatpush1.msra.mxu0 0.0
    %157 = vmatprep.subr.mxu0 0.0
    %158 = vmatpush1.msra.mxu0 0.0
    %159 = vmatprep.subr.mxu0 0.0
    %160 = vmatpush1.msra.mxu0 0.0
    %161 = vmatprep.subr.mxu0 0.0
    %162 = vmatpush1.msra.mxu0 0.0
    %163 = vmatprep.subr.mxu0 0.0
    %164 = vmatpush1.msra.mxu0 0.0
    %165 = vmatprep.subr.mxu0 0.0
    %166 = vmatpush1.msra.mxu0 0.0
    %167 = vmatprep.subr.mxu0 0.0
    %168 = vmatpush1.msra.mxu0 0.0
    %169 = vmatprep.subr.mxu0 0.0
    %170 = vmatpush1.msra.mxu0 0.0
    %171 = vmatprep.subr.mxu0 0.0
    %172 = vmatpush1.msra.mxu0 0.0
    %173 = vmatprep.subr.mxu0 0.0
    %174 = vmatpush1.msra.mxu0 0.0
    %175 = vmatprep.subr.mxu0 0.0
    %176 = vmatpush1.msra.mxu0 0.0
    %177 = vmatprep.subr.mxu0 0.0
    %178 = vmatpush1.msra.mxu0 0.0
    %179 = vmatprep.subr.mxu0 0.0
    %180 = vmatpush1.msra.mxu0 0.0
    %181 = vmatprep.subr.mxu0 0.0
    %182 = vmatpush1.msra.mxu0 0.0
    %183 = vmatprep.subr.mxu0 0.0
    %184 = vmatpush1.msra.mxu0 0.0
    %185 = vmatprep.subr.mxu0 0.0
    %186 = vmatpush1.msra.mxu0 0.0
    %187 = vmatprep.subr.mxu0 0.0
    %188 = vmatpush1.msra.mxu0 0.0
    %189 = vmatprep.subr.mxu0 0.0
    %190 = vmatpush1.msra.mxu0 0.0
    %191 = vmatprep.subr.mxu0 0.0
    %192 = vmatpush1.msra.mxu0 0.0
    %193 = vmatprep.subr.mxu0 0.0
    %194 = vmatpush1.msra.mxu0 0.0
    %195 = vmatprep.subr.mxu0 0.0
    %196 = vmatpush1.msra.mxu0 0.0
    %197 = vmatprep.subr.mxu0 0.0
    %198 = vmatpush1.msra.mxu0 0.0
    %199 = vmatprep.subr.mxu0 0.0
    %200 = vmatpush1.msra.mxu0 0.0
    %201 = vmatprep.subr.mxu0 0.0
    %202 = vmatpush1.msra.mxu0 0.0
    %203 = vmatprep.subr.mxu0 0.0
    %204 = vmatpush1.msra.mxu0 0.0
    %205 = vmatprep.subr.mxu0 0.0
    %206 = vmatpush1.msra.mxu0 0.0
    %207 = vmatprep.subr.mxu0 0.0
    %208 = vmatpush1.msra.mxu0 0.0
    %209 = vmatprep.mubr.f32.mxu0 0.0
    %210 = vmatmul.mubr.f32.gmra.mrb[0].mxu0 %v143
    %v211 = vpop.f32.mrb[0].mxu0
    %v212 = vadd.f32 %v140, %v211
    %v213 = vpop.f32.mrb[0].mxu0
    %214 = vdwg.mxu0
    %v215 = vmax.f32 %v212, 0.0
    %v216 = vlaneseq
    %v217 = vshrl.u32 %v216, 7
    %v218 = vsub.s32 0, %v217
    %v219 = vrot.slane %v55, %v218
    %v221 = vsel %vm141, %v215, 0
    %223 = vmatprep.subr.mxu0 0.0
    %224 = vmatpush1.msra.mxu0 %v33
    %225 = vmatprep.subr.mxu0 0.0
    %226 = vmatpush1.msra.mxu0 %v34
    %227 = vmatprep.subr.mxu0 0.0
    %228 = vmatpush1.msra.mxu0 %v35
    %229 = vmatprep.subr.mxu0 0.0
    %230 = vmatpush1.msra.mxu0 %v36
    %231 = vmatprep.subr.mxu0 0.0
    %232 = vmatpush1.msra.mxu0 0.0
    %233 = vmatprep.subr.mxu0 0.0
    %234 = vmatpush1.msra.mxu0 0.0
    %235 = vmatprep.subr.mxu0 0.0
    %236 = vmatpush1.msra.mxu0 0.0
    %237 = vmatprep.subr.mxu0 0.0
    %238 = vmatpush1.msra.mxu0 0.0
    %239 = vmatprep.subr.mxu0 0.0
    %240 = vmatpush1.msra.mxu0 0.0
    %241 = vmatprep.subr.mxu0 0.0
    %242 = vmatpush1.msra.mxu0 0.0
    %243 = vmatprep.subr.mxu0 0.0
    %244 = vmatpush1.msra.mxu0 0.0
    %245 = vmatprep.subr.mxu0 0.0
    %246 = vmatpush1.msra.mxu0 0.0
    %247 = vmatprep.subr.mxu0 0.0
    %248 = vmatpush1.msra.mxu0 0.0
    %249 = vmatprep.subr.mxu0 0.0
    %250 = vmatpush1.msra.mxu0 0.0
    %251 = vmatprep.subr.mxu0 0.0
    %252 = vmatpush1.msra.mxu0 0.0
    %253 = vmatprep.subr.mxu0 0.0
    %254 = vmatpush1.msra.mxu0 0.0
    %255 = vmatprep.subr.mxu0 0.0
    %256 = vmatpush1.msra.mxu0 0.0
    %257 = vmatprep.subr.mxu0 0.0
    %258 = vmatpush1.msra.mxu0 0.0
    %259 = vmatprep.subr.mxu0 0.0
    %260 = vmatpush1.msra.mxu0 0.0
    %261 = vmatprep.subr.mxu0 0.0
    %262 = vmatpush1.msra.mxu0 0.0
    %263 = vmatprep.subr.mxu0 0.0
    %264 = vmatpush1.msra.mxu0 0.0
    %265 = vmatprep.subr.mxu0 0.0
    %266 = vmatpush1.msra.mxu0 0.0
    %267 = vmatprep.subr.mxu0 0.0
    %268 = vmatpush1.msra.mxu0 0.0
    %269 = vmatprep.subr.mxu0 0.0
    %270 = vmatpush1.msra.mxu0 0.0
    %271 = vmatprep.subr.mxu0 0.0
    %272 = vmatpush1.msra.mxu0 0.0
    %273 = vmatprep.subr.mxu0 0.0
    %274 = vmatpush1.msra.mxu0 0.0
    %275 = vmatprep.subr.mxu0 0.0
    %276 = vmatpush1.msra.mxu0 0.0
    %277 = vmatprep.subr.mxu0 0.0
    %278 = vmatpush1.msra.mxu0 0.0
    %279 = vmatprep.subr.mxu0 0.0
    %280 = vmatpush1.msra.mxu0 0.0
    %281 = vmatprep.subr.mxu0 0.0
    %282 = vmatpush1.msra.mxu0 0.0
    %283 = vmatprep.subr.mxu0 0.0
    %284 = vmatpush1.msra.mxu0 0.0
    %285 = vmatprep.subr.mxu0 0.0
    %286 = vmatpush1.msra.mxu0 0.0
    %287 = vmatprep.mubr.f32.mxu0 0.0
    %288 = vmatmul.mubr.f32.gmra.mrb[0].mxu0 %v221
    %v289 = vpop.f32.mrb[0].mxu0
    %v290 = vadd.f32 %v219, %v289
    %v291 = vpop.f32.mrb[0].mxu0
    %292 = vdwg.mxu0
    %v293 = vmax.f32 %v290, 0.0
    %v294 = vlaneseq
    %v295 = vshrl.u32 %v294, 7
    %v296 = vsub.s32 0, %v295
    %v297 = vrot.slane %v56, %v296
    %v299 = vsel %vm141, %v293, 0
    %301 = vmatprep.subr.mxu0 0.0
    %302 = vmatpush1.msra.mxu0 %v37
    %303 = vmatprep.subr.mxu0 0.0
    %304 = vmatpush1.msra.mxu0 %v38
    %305 = vmatprep.subr.mxu0 0.0
    %306 = vmatpush1.msra.mxu0 %v39
    %307 = vmatprep.subr.mxu0 0.0
    %308 = vmatpush1.msra.mxu0 %v40
    %309 = vmatprep.subr.mxu0 0.0
    %310 = vmatpush1.msra.mxu0 0.0
    %311 = vmatprep.subr.mxu0 0.0
    %312 = vmatpush1.msra.mxu0 0.0
    %313 = vmatprep.subr.mxu0 0.0
    %314 = vmatpush1.msra.mxu0 0.0
    %315 = vmatprep.subr.mxu0 0.0
    %316 = vmatpush1.msra.mxu0 0.0
    %317 = vmatprep.subr.mxu0 0.0
    %318 = vmatpush1.msra.mxu0 0.0
    %319 = vmatprep.subr.mxu0 0.0
    %320 = vmatpush1.msra.mxu0 0.0
    %321 = vmatprep.subr.mxu0 0.0
    %322 = vmatpush1.msra.mxu0 0.0
    %323 = vmatprep.subr.mxu0 0.0
    %324 = vmatpush1.msra.mxu0 0.0
    %325 = vmatprep.subr.mxu0 0.0
    %326 = vmatpush1.msra.mxu0 0.0
    %327 = vmatprep.subr.mxu0 0.0
    %328 = vmatpush1.msra.mxu0 0.0
    %329 = vmatprep.subr.mxu0 0.0
    %330 = vmatpush1.msra.mxu0 0.0
    %331 = vmatprep.subr.mxu0 0.0
    %332 = vmatpush1.msra.mxu0 0.0
    %333 = vmatprep.subr.mxu0 0.0
    %334 = vmatpush1.msra.mxu0 0.0
    %335 = vmatprep.subr.mxu0 0.0
    %336 = vmatpush1.msra.mxu0 0.0
    %337 = vmatprep.subr.mxu0 0.0
    %338 = vmatpush1.msra.mxu0 0.0
    %339 = vmatprep.subr.mxu0 0.0
    %340 = vmatpush1.msra.mxu0 0.0
    %341 = vmatprep.subr.mxu0 0.0
    %342 = vmatpush1.msra.mxu0 0.0
    %343 = vmatprep.subr.mxu0 0.0
    %344 = vmatpush1.msra.mxu0 0.0
    %345 = vmatprep.subr.mxu0 0.0
    %346 = vmatpush1.msra.mxu0 0.0
    %347 = vmatprep.subr.mxu0 0.0
    %348 = vmatpush1.msra.mxu0 0.0
    %349 = vmatprep.subr.mxu0 0.0
    %350 = vmatpush1.msra.mxu0 0.0
    %351 = vmatprep.subr.mxu0 0.0
    %352 = vmatpush1.msra.mxu0 0.0
    %353 = vmatprep.subr.mxu0 0.0
    %354 = vmatpush1.msra.mxu0 0.0
    %355 = vmatprep.subr.mxu0 0.0
    %356 = vmatpush1.msra.mxu0 0.0
    %357 = vmatprep.subr.mxu0 0.0
    %358 = vmatpush1.msra.mxu0 0.0
    %359 = vmatprep.subr.mxu0 0.0
    %360 = vmatpush1.msra.mxu0 0.0
    %361 = vmatprep.subr.mxu0 0.0
    %362 = vmatpush1.msra.mxu0 0.0
    %363 = vmatprep.subr.mxu0 0.0
    %364 = vmatpush1.msra.mxu0 0.0
    %365 = vmatprep.mubr.f32.mxu0 0.0
    %366 = vmatmul.mubr.f32.gmra.mrb[0].mxu0 %v299
    %v367 = vpop.f32.mrb[0].mxu0
    %v368 = vadd.f32 %v297, %v367
    %v369 = vpop.f32.mrb[0].mxu0
    %370 = vdwg.mxu0
    %v371 = vlaneseq
    %v372 = vshrl.u32 %v371, 7
    %v373 = vsub.s32 0, %v372
    %v374 = vrot.slane %v57, %v373
    %375 = vrot.lane.b32.xlu0 %v136, 96
    %v376 = vpop.permute.xlu0 %375
    %v377 = vsel %vm141, %v376, 0
    %379 = vmatprep.subr.mxu0 0.0
    %380 = vmatpush1.msra.mxu0 %v41
    %381 = vmatprep.subr.mxu0 0.0
    %382 = vmatpush1.msra.mxu0 %v42
    %383 = vmatprep.subr.mxu0 0.0
    %384 = vmatpush1.msra.mxu0 %v43
    %385 = vmatprep.subr.mxu0 0.0
    %386 = vmatpush1.msra.mxu0 %v44
    %387 = vmatprep.subr.mxu0 0.0
    %388 = vmatpush1.msra.mxu0 0.0
    %389 = vmatprep.subr.mxu0 0.0
    %390 = vmatpush1.msra.mxu0 0.0
    %391 = vmatprep.subr.mxu0 0.0
    %392 = vmatpush1.msra.mxu0 0.0
    %393 = vmatprep.subr.mxu0 0.0
    %394 = vmatpush1.msra.mxu0 0.0
    %395 = vmatprep.subr.mxu0 0.0
    %396 = vmatpush1.msra.mxu0 0.0
    %397 = vmatprep.subr.mxu0 0.0
    %398 = vmatpush1.msra.mxu0 0.0
    %399 = vmatprep.subr.mxu0 0.0
    %400 = vmatpush1.msra.mxu0 0.0
    %401 = vmatprep.subr.mxu0 0.0
    %402 = vmatpush1.msra.mxu0 0.0
    %403 = vmatprep.subr.mxu0 0.0
    %404 = vmatpush1.msra.mxu0 0.0
    %405 = vmatprep.subr.mxu0 0.0
    %406 = vmatpush1.msra.mxu0 0.0
    %407 = vmatprep.subr.mxu0 0.0
    %408 = vmatpush1.msra.mxu0 0.0
    %409 = vmatprep.subr.mxu0 0.0
    %410 = vmatpush1.msra.mxu0 0.0
    %411 = vmatprep.subr.mxu0 0.0
    %412 = vmatpush1.msra.mxu0 0.0
    %413 = vmatprep.subr.mxu0 0.0
    %414 = vmatpush1.msra.mxu0 0.0
    %415 = vmatprep.subr.mxu0 0.0
    %416 = vmatpush1.msra.mxu0 0.0
    %417 = vmatprep.subr.mxu0 0.0
    %418 = vmatpush1.msra.mxu0 0.0
    %419 = vmatprep.subr.mxu0 0.0
    %420 = vmatpush1.msra.mxu0 0.0
    %421 = vmatprep.subr.mxu0 0.0
    %422 = vmatpush1.msra.mxu0 0.0
    %423 = vmatprep.subr.mxu0 0.0
    %424 = vmatpush1.msra.mxu0 0.0
    %425 = vmatprep.subr.mxu0 0.0
    %426 = vmatpush1.msra.mxu0 0.0
    %427 = vmatprep.subr.mxu0 0.0
    %428 = vmatpush1.msra.mxu0 0.0
    %429 = vmatprep.subr.mxu0 0.0
    %430 = vmatpush1.msra.mxu0 0.0
    %431 = vmatprep.subr.mxu0 0.0
    %432 = vmatpush1.msra.mxu0 0.0
    %433 = vmatprep.subr.mxu0 0.0
    %434 = vmatpush1.msra.mxu0 0.0
    %435 = vmatprep.subr.mxu0 0.0
    %436 = vmatpush1.msra.mxu0 0.0
    %437 = vmatprep.subr.mxu0 0.0
    %438 = vmatpush1.msra.mxu0 0.0
    %439 = vmatprep.subr.mxu0 0.0
    %440 = vmatpush1.msra.mxu0 0.0
    %441 = vmatprep.subr.mxu0 0.0
    %442 = vmatpush1.msra.mxu0 0.0
    %443 = vmatprep.mubr.f32.mxu0 0.0
    %444 = vmatmul.mubr.f32.gmra.mrb[0].mxu0 %v377
    %v445 = vpop.f32.mrb[0].mxu0
    %v446 = vadd.f32 %v374, %v445
    %v447 = vpop.f32.mrb[0].mxu0
    %448 = vdwg.mxu0
    %v449 = vtanh.pop %v446
    %451 = vrot.lane.b32.xlu0 %v133, 64
    %v452 = vpop.permute.xlu0 %451
    %v454 = vsub.f32 %v449, %v452
    %v455 = vmul.f32 %v454, %v454
    %vm456 = vcmask 523264
    %v458 = vsel %vm456, %v455, 0
    %460 = vmatprep.subr.mxu0 0.0
    %461 = vmatpush1.msra.mxu0 %v45
    %462 = vmatprep.subr.mxu0 0.0
    %463 = vmatpush1.msra.mxu0 %v46
    %464 = vmatprep.subr.mxu0 0.0
    %465 = vmatpush1.msra.mxu0 %v47
    %466 = vmatprep.subr.mxu0 0.0
    %467 = vmatpush1.msra.mxu0 %v48
    %468 = vmatprep.subr.mxu0 0.0
    %469 = vmatpush1.msra.mxu0 %v49
    %470 = vmatprep.subr.mxu0 0.0
    %471 = vmatpush1.msra.mxu0 %v50
    %472 = vmatprep.subr.mxu0 0.0
    %473 = vmatpush1.msra.mxu0 %v51
    %474 = vmatprep.subr.mxu0 0.0
    %475 = vmatpush1.msra.mxu0 %v52
    %476 = vmatprep.subr.mxu0 0.0
    %477 = vmatpush1.msra.mxu0 0.0
    %478 = vmatprep.subr.mxu0 0.0
    %479 = vmatpush1.msra.mxu0 0.0
    %480 = vmatprep.subr.mxu0 0.0
    %481 = vmatpush1.msra.mxu0 0.0
    %482 = vmatprep.subr.mxu0 0.0
    %483 = vmatpush1.msra.mxu0 0.0
    %484 = vmatprep.subr.mxu0 0.0
    %485 = vmatpush1.msra.mxu0 0.0
    %486 = vmatprep.subr.mxu0 0.0
    %487 = vmatpush1.msra.mxu0 0.0
    %488 = vmatprep.subr.mxu0 0.0
    %489 = vmatpush1.msra.mxu0 0.0
    %490 = vmatprep.subr.mxu0 0.0
    %491 = vmatpush1.msra.mxu0 0.0
    %492 = vmatprep.subr.mxu0 0.0
    %493 = vmatpush1.msra.mxu0 0.0
    %494 = vmatprep.subr.mxu0 0.0
    %495 = vmatpush1.msra.mxu0 0.0
    %496 = vmatprep.subr.mxu0 0.0
    %497 = vmatpush1.msra.mxu0 0.0
    %498 = vmatprep.subr.mxu0 0.0
    %499 = vmatpush1.msra.mxu0 0.0
    %500 = vmatprep.subr.mxu0 0.0
    %501 = vmatpush1.msra.mxu0 0.0
    %502 = vmatprep.subr.mxu0 0.0
    %503 = vmatpush1.msra.mxu0 0.0
    %504 = vmatprep.subr.mxu0 0.0
    %505 = vmatpush1.msra.mxu0 0.0
    %506 = vmatprep.subr.mxu0 0.0
    %507 = vmatpush1.msra.mxu0 0.0
    %508 = vmatprep.subr.mxu0 0.0
    %509 = vmatpush1.msra.mxu0 0.0
    %510 = vmatprep.subr.mxu0 0.0
    %511 = vmatpush1.msra.mxu0 0.0
    %512 = vmatprep.subr.mxu0 0.0
    %513 = vmatpush1.msra.mxu0 0.0
    %514 = vmatprep.subr.mxu0 0.0
    %515 = vmatpush1.msra.mxu0 0.0
    %516 = vmatprep.subr.mxu0 0.0
    %517 = vmatpush1.msra.mxu0 0.0
    %518 = vmatprep.subr.mxu0 0.0
    %519 = vmatpush1.msra.mxu0 0.0
    %520 = vmatprep.subr.mxu0 0.0
    %521 = vmatpush1.msra.mxu0 0.0
    %522 = vmatprep.subr.mxu0 0.0
    %523 = vmatpush1.msra.mxu0 0.0
    %524 = vmatprep.mubr.f32.mxu0 0.0
    %525 = vmatmul.mubr.f32.gmra.mrb[0].mxu0 %v458
    %v526 = vpop.f32.mrb[0].mxu0
    %v527 = vadd.f32 1e-07, %v526
    %v528 = vpop.f32.mrb[0].mxu0
    %529 = vdwg.mxu0
    %v530 = vrsqrt.pop %v527
    %v531 = vmul.f32 %v527, %v530
    %vm532 = vcmp.eq.f32.partialorder %v527, inf
    %v533 = vsel %vm532, %v527, %v531
    %vm534 = vcmp.eq.f32.partialorder %v527, 0.0
    %v535 = vand.u32 %v527, 2147483648
    %v536 = vsel %vm534, %v535, %v533
    %v537 = vmul.f32 %v536, -2.0
    %v538 = vmul.f32 %v537, 1.442695
    %v539 = vpow.pop %v538
    %540 = vadd.xlane.f32.xlu0 %v539
    %v541 = vpop.xlane.xlu0 %540
    %v542 = vrcp.pop %v541
    %v543 = vmul.f32 %v542, 8.0
    %v544 = vmul.f32 %v539, %v543
    %v545 = vmul.f32 %v544, %v368
    %546 = vrot.lane.b32.xlu0 %v545, 64
    %v547 = vpop.permute.xlu0 %546
    %v548 = vadd.f32 %v545, %v547
    %549 = vrot.lane.b32.xlu0 %v548, 32
    %v550 = vpop.permute.xlu0 %549
    %v551 = vadd.f32 %v548, %v550
    %552 = vrot.lane.b32.xlu0 %v551, 16
    %v553 = vpop.permute.xlu0 %552
    %v554 = vadd.f32 %v551, %v553
    %555 = vrot.lane.b32.xlu0 %v554, 8
    %v556 = vpop.permute.xlu0 %555
    %v557 = vadd.f32 %v554, %v556
    %558 = vst [vmem:[#allocation5] sm:$0xff] %v557
    // Predicated region
    $region14: #{net_forward.1} parent=1 // pred_check
      _
    $region15: #{net_forward.1} parent=1 // pred_check_branch
      %560 = sbr.rel (0) target = $region17
    $region16: #{net_forward.1} parent=1 // pred_region
      %s562 = ssub.s32 128, 128
      %563 = vsyncadd [#allocation4], %s562
      %s565 = sshll.u32 [#allocation5], 4
      %s566 = int_to_ptr.vmem [resolvable:$true] %s565
      %568 = dma.vmem_to_hbm [thread:$0]  %s566, 128, %s2, [#allocation4]
    $region17: #{net_forward.1} parent=1 // pred_fallthru
      _
    // Predicated region
    $region18: #{net_forward.1} parent=1 // pred_check
      _
    $region19: #{net_forward.1} parent=1 // pred_check_branch
      %570 = sbr.rel (0) target = $region21
    $region20: #{net_forward.1} parent=1 // pred_region
      %571 = dma.done [#allocation4], 128
    $region21: #{net_forward.1} parent=1 // pred_fallthru
      _
    %572 = vsyncpa [#allocation3], 1
    %573 = vsyncpa [#allocation4], 1

</llo_original>
